<compile_context>
chip_gen: v5e
topology: v5e:2x2
jax: 0.10.0
libtpu: 0.0.40
codegen_flags: <defaults>
</compile_context>

<pallas_src>
import functools

import jax
import jax.numpy as jnp
from jax.experimental import pallas as pl
from jax.experimental.pallas import tpu as pltpu

LN_EPS = 1e-5  # torch.nn.LayerNorm default


def _round_up(x, m):
    return (x + m - 1) // m * m


def _vmem_capacity_bytes():
    try:
        return int(pltpu.get_tpu_info().vmem_capacity_bytes)
    except Exception:
        return 64 * 1024 * 1024  # conservative: v7x per-TC VMEM


def _default_row_tile():
    try:
        kind = jax.devices()[0].device_kind.lower()
    except Exception:
        return 256
    if "v5" in kind:
        return 128   # v5e MXU M-tile is 128; halves hidden slab / vst pressure
    if "v6" in kind:
        return 512   # 128 MiB VMEM -> bigger tiles, fewer grid steps
    return 256       # v7x and unknown


def _spec(shape, index_map, *, single=False):
    # Single-buffer operands whose block never changes (no re-DMA anyway).
    if single:
        try:
            return pl.BlockSpec(shape, index_map, pipeline_mode=pl.Buffered(1))
        except TypeError:  # older JAX without pipeline_mode
            pass
    return pl.BlockSpec(shape, index_map)


def ffn_kernel(x_ref, g_ref, be_ref, w1_ref, b1_ref, w2_ref, b2_ref, o_ref,
               xn_ref, acc_ref, *, true_l):
    k = pl.program_id(1)

    @pl.when(k == 0)
    def _():
        # LayerNorm in f32 over the true L features.  Padded lanes of x are
        # zero and gamma/beta are zero-padded, so padded lanes of xn are 0.
        x = x_ref[...].astype(jnp.float32)
        inv_l = jnp.float32(1.0 / true_l)
        mean = jnp.sum(x, axis=-1, keepdims=True) * inv_l
        ex2 = jnp.sum(x * x, axis=-1, keepdims=True) * inv_l
        var = jnp.maximum(ex2 - mean * mean, 0.0)      # guard cancellation
        xn = (x - mean) * jax.lax.rsqrt(var + LN_EPS)
        xn = xn * g_ref[...] + be_ref[...]
        xn_ref[...] = xn.astype(jnp.bfloat16)
        acc_ref[...] = jnp.zeros_like(acc_ref)

    # dense1 for this hidden tile: Linear(L -> th) + bias + ReLU (f32), then
    # bf16 for the second MXU matmul.  Dropout(p=0.0)/eval -> identity.
    h = jnp.dot(xn_ref[...], w1_ref[...], preferred_element_type=jnp.float32)
    h = jnp.maximum(h + b1_ref[...], 0.0).astype(jnp.bfloat16)

    # dense2 partial product, accumulated in f32 across hidden tiles.
    acc_ref[...] += jnp.dot(h, w2_ref[...], preferred_element_type=jnp.float32)

    @pl.when(k == pl.num_programs(1) - 1)
    def _():
        o_ref[...] = (acc_ref[...] + b2_ref[...]).astype(o_ref.dtype)


def prepare_ffn_params(gamma, beta, w1t, b1, w2t, b2):
    """Pad + cast parameters ONCE (model init), not per forward call.

    w1t: (L, 2L) = W1^T, w2t: (2L, L) = W2^T, all UNPADDED (zero padding of
    gamma/beta/b1/b2 is what keeps padded lanes exactly zero in the kernel).
    """
    L = int(gamma.shape[0])
    H = 2 * L
    assert w1t.shape == (L, H) and w2t.shape == (H, L)
    assert b1.shape == (H,) and b2.shape == (L,) and beta.shape == (L,)

    Lp = _round_up(L, 128)
    Hp = _round_up(H, 128)
    vmem_cap = _vmem_capacity_bytes()

    # Hidden-dim tiling policy: keep both bf16 weights fully resident
    # (single-buffered) when they fit a conservative slice of VMEM; otherwise
    # tile 2L so only (Lp, th) + (th, Lp) bf16 blocks are live (double-buffered).
    weight_budget = int(0.55 * vmem_cap)
    if 2 * Lp * Hp * 2 <= weight_budget:
        th = Hp
    else:
        th = 1024
        while th > 256 and 2 * (2 * Lp * th * 2) > weight_budget:
            th //= 2
        Hp = _round_up(Hp, th)

    params = dict(
        gamma=jnp.pad(gamma.astype(jnp.float32), (0, Lp - L)).reshape(1, Lp),
        beta=jnp.pad(beta.astype(jnp.float32), (0, Lp - L)).reshape(1, Lp),
        w1=jnp.pad(w1t.astype(jnp.bfloat16), ((0, Lp - L), (0, Hp - H))),
        b1=jnp.pad(b1.astype(jnp.float32), (0, Hp - H)).reshape(1, Hp),
        w2=jnp.pad(w2t.astype(jnp.bfloat16), ((0, Hp - H), (0, Lp - L))),
        b2=jnp.pad(b2.astype(jnp.float32), (0, Lp - L)).reshape(1, Lp),
    )
    meta = dict(L=L, Lp=Lp, Hp=Hp, th=th, vmem_cap=vmem_cap)
    return params, meta


def feed_forward_block(x, params, meta, *, row_tile=None):
    """x: (N, C, L); params/meta from prepare_ffn_params()."""
    N, C, L = x.shape
    assert L == meta["L"]
    Lp, Hp, th = meta["Lp"], meta["Hp"], meta["th"]
    R = N * C

    if row_tile is None:
        row_tile = _default_row_tile()
    r8 = _round_up(R, 8)
    rt = max(8, min(_round_up(row_tile, 8), r8))
    # Guarantee >= 2 row grid steps when possible so v7x's two TensorCores
    # both get work on the "parallel" row axis.
    if r8 >= 16:
        rt = min(rt, _round_up((r8 + 1) // 2, 8))
    Rp = _round_up(R, rt)

    x2 = x.reshape(R, L)
    if Rp != R or Lp != L:
        x2 = jnp.pad(x2, ((0, Rp - R), (0, Lp - L)))

    nk = Hp // th
    const_w = (nk == 1)  # weight blocks constant over the whole grid?

    # VMEM budget (already accounts for double buffering where it happens).
    xbytes = x2.dtype.itemsize
    wbuf = 1 if const_w else 2
    est = (2 * rt * Lp * xbytes          # x tiles
           + 2 * rt * Lp * xbytes        # out tiles
           + rt * Lp * 2                 # xn scratch (bf16)
           + rt * Lp * 4                 # acc scratch (f32)
           + wbuf * 2 * (Lp * th) * 2    # bf16 weight blocks (W1 + W2)
           + 4 * (3 * Lp + 2 * th))      # gamma/beta/b1/b2
    cap = int(0.85 * meta["vmem_cap"])   # stay under physical VMEM (v7x 64MiB)
    vmem_limit = int(min(max(int(est * 1.25) + (4 << 20), 32 << 20), cap))

    kernel = functools.partial(ffn_kernel, true_l=float(L))
    out = pl.pallas_call(
        kernel,
        out_shape=jax.ShapeDtypeStruct((Rp, Lp), x.dtype),
        grid_spec=pltpu.PrefetchScalarGridSpec(
            num_scalar_prefetch=0,
            grid=(Rp // rt, nk),
            in_specs=[
                pl.BlockSpec((rt, Lp), lambda i, k: (i, 0)),          # x rows
                _spec((1, Lp), lambda i, k: (0, 0), single=True),      # gamma
                _spec((1, Lp), lambda i, k: (0, 0), single=True),      # beta
                _spec((Lp, th), lambda i, k: (0, k), single=const_w),  # W1^T
                _spec((1, th), lambda i, k: (0, k), single=const_w),   # b1
                _spec((th, Lp), lambda i, k: (k, 0), single=const_w),  # W2^T
                _spec((1, Lp), lambda i, k: (0, 0), single=True),      # b2
            ],
            out_specs=pl.BlockSpec((rt, Lp), lambda i, k: (i, 0)),
            scratch_shapes=[
                pltpu.VMEM((rt, Lp), jnp.bfloat16),   # normalized x, reused over k
                pltpu.VMEM((rt, Lp), jnp.float32),    # dense2 accumulator
            ],
        ),
        compiler_params=pltpu.CompilerParams(
            dimension_semantics=("parallel", "arbitrary"),
            vmem_limit_bytes=vmem_limit),
    )(x2, params["gamma"], params["beta"], params["w1"], params["b1"],
      params["w2"], params["b2"])

    if Rp != R or Lp != L:
        out = out[:R, :L]
    return out.reshape(N, C, L)


def reference(x, gamma, beta, w1t, b1, w2t, b2):
    xf = x.astype(jnp.float32)
    mean = jnp.mean(xf, axis=-1, keepdims=True)
    var = jnp.mean((xf - mean) ** 2, axis=-1, keepdims=True)
    xn = (xf - mean) / jnp.sqrt(var + LN_EPS) * gamma + beta
    h = jnp.maximum(xn @ w1t + b1, 0.0)
    return h @ w2t + b2


if __name__ == "__main__":
    # Small shapes consistent with the module: (N, C, L) with in_len = L.
    N, C, L = 2, 4, 32
    key = jax.random.PRNGKey(0)
    kx, k1, k2, k3, k4 = jax.random.split(key, 5)

    x = jax.random.normal(kx, (N, C, L), dtype=jnp.float32)

    # Deterministic synthetic parameters (mimics torch.nn.Linear init scale).
    gamma = jnp.ones((L,), jnp.float32)            # LayerNorm weight
    beta = jnp.zeros((L,), jnp.float32)            # LayerNorm bias
    bound1 = 1.0 / jnp.sqrt(L)
    w1t = jax.random.uniform(k1, (L, 2 * L), jnp.float32, -bound1, bound1)  # W1^T
    b1 = jax.random.uniform(k2, (2 * L,), jnp.float32, -bound1, bound1)
    bound2 = 1.0 / jnp.sqrt(2 * L)
    w2t = jax.random.uniform(k3, (2 * L, L), jnp.float32, -bound2, bound2)  # W2^T
    b2 = jax.random.uniform(k4, (L,), jnp.float32, -bound2, bound2)

    # One-time parameter preparation (pad + bf16 cast hoisted out of the call).
    params, meta = prepare_ffn_params(gamma, beta, w1t, b1, w2t, b2)

    out = feed_forward_block(x, params, meta)
    out = jax.block_until_ready(out)

    ref = reference(x, gamma, beta, w1t, b1, w2t, b2)
    assert out.shape == (N, C, L)
    # bf16 MXU operands with f32 accumulation -> tolerance loosened vs pure f32.
    assert jnp.allclose(out, ref, atol=3e-2, rtol=3e-2), float(
        jnp.max(jnp.abs(out - ref)))
    print("KERNEL_OK")
</pallas_src>

<mosaic_0001>
module attributes {stable_mosaic.version = 11 : i64} {
  func.func @ffn_kernel(%arg0: i32, %arg1: i32, %arg2: memref<8x128xf32, #tpu.memory_space<vmem>>, %arg3: memref<1x128xf32, #tpu.memory_space<vmem>>, %arg4: memref<1x128xf32, #tpu.memory_space<vmem>>, %arg5: memref<128x128xbf16, #tpu.memory_space<vmem>>, %arg6: memref<1x128xf32, #tpu.memory_space<vmem>>, %arg7: memref<128x128xbf16, #tpu.memory_space<vmem>>, %arg8: memref<1x128xf32, #tpu.memory_space<vmem>>, %arg9: memref<8x128xf32, #tpu.memory_space<vmem>>, %arg10: memref<8x128xbf16, #tpu.memory_space<vmem>>, %arg11: memref<8x128xf32, #tpu.memory_space<vmem>>) attributes {dimension_semantics = [#tpu.dimension_semantics<parallel>, #tpu.dimension_semantics<arbitrary>], iteration_bounds = array<i64: 1, 1>, scalar_prefetch = 0 : i64, scratch_operands = 2 : i64, tpu.core_type = #tpu.core_type<tc>, window_params = [{transform_indices = @transform_0, window_bounds = array<i64: 8, 128>}, {pipeline_mode = #tpu.pipeline_mode<synchronous>, transform_indices = @transform_1, window_bounds = array<i64: 1, 128>}, {pipeline_mode = #tpu.pipeline_mode<synchronous>, transform_indices = @transform_2, window_bounds = array<i64: 1, 128>}, {pipeline_mode = #tpu.pipeline_mode<synchronous>, transform_indices = @transform_3, window_bounds = array<i64: 128, 128>}, {pipeline_mode = #tpu.pipeline_mode<synchronous>, transform_indices = @transform_4, window_bounds = array<i64: 1, 128>}, {pipeline_mode = #tpu.pipeline_mode<synchronous>, transform_indices = @transform_5, window_bounds = array<i64: 128, 128>}, {pipeline_mode = #tpu.pipeline_mode<synchronous>, transform_indices = @transform_6, window_bounds = array<i64: 1, 128>}, {transform_indices = @transform_7, window_bounds = array<i64: 8, 128>}]} {
    %c0_i32 = arith.constant 0 : i32
    %0 = arith.cmpi eq, %arg1, %c0_i32 : i32
    %1 = arith.extui %0 : i1 to i32
    %c0_i32_0 = arith.constant 0 : i32
    %2 = arith.cmpi ne, %1, %c0_i32_0 : i32
    scf.if %2 {
      %c0_16 = arith.constant 0 : index
      %c0_17 = arith.constant 0 : index
      %20 = vector.load %arg2[%c0_16, %c0_17] : memref<8x128xf32, #tpu.memory_space<vmem>>, vector<8x128xf32>
      %cst_18 = arith.constant dense<0.000000e+00> : vector<8xf32>
      %21 = vector.multi_reduction <add>, %20, %cst_18 [1] : vector<8x128xf32> to vector<8xf32>
      %22 = vector.shape_cast %21 : vector<8xf32> to vector<8x1xf32>
      %cst_19 = arith.constant 3.125000e-02 : f32
      %23 = vector.broadcast %cst_19 : f32 to vector<8x1xf32>
      %24 = arith.mulf %22, %23 : vector<8x1xf32>
      %25 = arith.mulf %20, %20 : vector<8x128xf32>
      %cst_20 = arith.constant dense<0.000000e+00> : vector<8xf32>
      %26 = vector.multi_reduction <add>, %25, %cst_20 [1] : vector<8x128xf32> to vector<8xf32>
      %27 = vector.shape_cast %26 : vector<8xf32> to vector<8x1xf32>
      %cst_21 = arith.constant 3.125000e-02 : f32
      %28 = vector.broadcast %cst_21 : f32 to vector<8x1xf32>
      %29 = arith.mulf %27, %28 : vector<8x1xf32>
      %30 = arith.mulf %24, %24 : vector<8x1xf32>
      %31 = arith.subf %29, %30 : vector<8x1xf32>
      %cst_22 = arith.constant 0.000000e+00 : f32
      %32 = vector.broadcast %cst_22 : f32 to vector<8x1xf32>
      %33 = arith.maximumf %31, %32 : vector<8x1xf32>
      %34 = vector.broadcast %24 : vector<8x1xf32> to vector<8x128xf32>
      %35 = arith.subf %20, %34 : vector<8x128xf32>
      %cst_23 = arith.constant 9.99999974E-6 : f32
      %36 = vector.broadcast %cst_23 : f32 to vector<8x1xf32>
      %37 = arith.addf %33, %36 : vector<8x1xf32>
      %38 = math.rsqrt %37 : vector<8x1xf32>
      %39 = vector.broadcast %38 : vector<8x1xf32> to vector<8x128xf32>
      %40 = arith.mulf %35, %39 : vector<8x128xf32>
      %c0_24 = arith.constant 0 : index
      %c0_25 = arith.constant 0 : index
      %41 = vector.load %arg3[%c0_24, %c0_25] : memref<1x128xf32, #tpu.memory_space<vmem>>, vector<1x128xf32>
      %42 = vector.broadcast %41 : vector<1x128xf32> to vector<8x128xf32>
      %43 = arith.mulf %40, %42 : vector<8x128xf32>
      %c0_26 = arith.constant 0 : index
      %c0_27 = arith.constant 0 : index
      %44 = vector.load %arg4[%c0_26, %c0_27] : memref<1x128xf32, #tpu.memory_space<vmem>>, vector<1x128xf32>
      %45 = vector.broadcast %44 : vector<1x128xf32> to vector<8x128xf32>
      %46 = arith.addf %43, %45 : vector<8x128xf32>
      %47 = arith.truncf %46 : vector<8x128xf32> to vector<8x128xbf16>
      %c0_28 = arith.constant 0 : index
      %c0_29 = arith.constant 0 : index
      %48 = vector.load %arg10[%c0_28, %c0_29] : memref<8x128xbf16, #tpu.memory_space<vmem>>, vector<8x128xbf16>
      tpu.vector_store %arg10[%c0_28, %c0_29], %47 {strides = array<i32>} : memref<8x128xbf16, #tpu.memory_space<vmem>>, vector<8x128xbf16>,
      %cst_30 = arith.constant 0.000000e+00 : f32
      %49 = vector.broadcast %cst_30 : f32 to vector<8x128xf32>
      %c0_31 = arith.constant 0 : index
      %c0_32 = arith.constant 0 : index
      %50 = vector.load %arg11[%c0_31, %c0_32] : memref<8x128xf32, #tpu.memory_space<vmem>>, vector<8x128xf32>
      tpu.vector_store %arg11[%c0_31, %c0_32], %49 {strides = array<i32>} : memref<8x128xf32, #tpu.memory_space<vmem>>, vector<8x128xf32>,
    } else {
    }
    %c0 = arith.constant 0 : index
    %c0_1 = arith.constant 0 : index
    %3 = vector.load %arg10[%c0, %c0_1] : memref<8x128xbf16, #tpu.memory_space<vmem>>, vector<8x128xbf16>
    %c0_2 = arith.constant 0 : index
    %c0_3 = arith.constant 0 : index
    %4 = vector.load %arg5[%c0_2, %c0_3] : memref<128x128xbf16, #tpu.memory_space<vmem>>, vector<128x128xbf16>
    %cst = arith.constant dense<0.000000e+00> : vector<8x128xf32>
    %5 = tpu.matmul %3, %4, %cst {dimension_numbers = #tpu.dot_dimension_numbers<[1], [0], [0], [1], [0, 0, 1, 1], [], []>} : vector<8x128xbf16>, vector<128x128xbf16>, vector<8x128xf32> -> vector<8x128xf32>
    %c0_4 = arith.constant 0 : index
    %c0_5 = arith.constant 0 : index
    %6 = vector.load %arg6[%c0_4, %c0_5] : memref<1x128xf32, #tpu.memory_space<vmem>>, vector<1x128xf32>
    %7 = vector.broadcast %6 : vector<1x128xf32> to vector<8x128xf32>
    %8 = arith.addf %5, %7 : vector<8x128xf32>
    %cst_6 = arith.constant 0.000000e+00 : f32
    %9 = vector.broadcast %cst_6 : f32 to vector<8x128xf32>
    %10 = arith.maximumf %8, %9 : vector<8x128xf32>
    %11 = arith.truncf %10 : vector<8x128xf32> to vector<8x128xbf16>
    %c0_7 = arith.constant 0 : index
    %c0_8 = arith.constant 0 : index
    %12 = vector.load %arg11[%c0_7, %c0_8] : memref<8x128xf32, #tpu.memory_space<vmem>>, vector<8x128xf32>
    %c0_9 = arith.constant 0 : index
    %c0_10 = arith.constant 0 : index
    %13 = vector.load %arg7[%c0_9, %c0_10] : memref<128x128xbf16, #tpu.memory_space<vmem>>, vector<128x128xbf16>
    %cst_11 = arith.constant dense<0.000000e+00> : vector<8x128xf32>
    %14 = tpu.matmul %11, %13, %cst_11 {dimension_numbers = #tpu.dot_dimension_numbers<[1], [0], [0], [1], [0, 0, 1, 1], [], []>} : vector<8x128xbf16>, vector<128x128xbf16>, vector<8x128xf32> -> vector<8x128xf32>
    %15 = arith.addf %12, %14 : vector<8x128xf32>
    %c0_12 = arith.constant 0 : index
    %c0_13 = arith.constant 0 : index
    %16 = vector.load %arg11[%c0_12, %c0_13] : memref<8x128xf32, #tpu.memory_space<vmem>>, vector<8x128xf32>
    tpu.vector_store %arg11[%c0_12, %c0_13], %15 {strides = array<i32>} : memref<8x128xf32, #tpu.memory_space<vmem>>, vector<8x128xf32>,
    %c0_i32_14 = arith.constant 0 : i32
    %17 = arith.cmpi eq, %arg1, %c0_i32_14 : i32
    %18 = arith.extui %17 : i1 to i32
    %c0_i32_15 = arith.constant 0 : i32
    %19 = arith.cmpi ne, %18, %c0_i32_15 : i32
    scf.if %19 {
      %c0_16 = arith.constant 0 : index
      %c0_17 = arith.constant 0 : index
      %20 = vector.load %arg11[%c0_16, %c0_17] : memref<8x128xf32, #tpu.memory_space<vmem>>, vector<8x128xf32>
      %c0_18 = arith.constant 0 : index
      %c0_19 = arith.constant 0 : index
      %21 = vector.load %arg8[%c0_18, %c0_19] : memref<1x128xf32, #tpu.memory_space<vmem>>, vector<1x128xf32>
      %22 = vector.broadcast %21 : vector<1x128xf32> to vector<8x128xf32>
      %23 = arith.addf %20, %22 : vector<8x128xf32>
      %c0_20 = arith.constant 0 : index
      %c0_21 = arith.constant 0 : index
      %24 = vector.load %arg9[%c0_20, %c0_21] : memref<8x128xf32, #tpu.memory_space<vmem>>, vector<8x128xf32>
      tpu.vector_store %arg9[%c0_20, %c0_21], %23 {strides = array<i32>} : memref<8x128xf32, #tpu.memory_space<vmem>>, vector<8x128xf32>,
    } else {
    }
    return
  }
  func.func @transform_0(%arg0: i32, %arg1: i32) -> (i32, i32) {
    %c0_i32 = arith.constant 0 : i32
    %c0_i32_0 = arith.constant 0 : i32
    return %arg0, %c0_i32 : i32, i32
  }
  func.func @transform_1(%arg0: i32, %arg1: i32) -> (i32, i32) {
    %c0_i32 = arith.constant 0 : i32
    %c0_i32_0 = arith.constant 0 : i32
    %c0_i32_1 = arith.constant 0 : i32
    return %c0_i32, %c0_i32_0 : i32, i32
  }
  func.func @transform_2(%arg0: i32, %arg1: i32) -> (i32, i32) {
    %c0_i32 = arith.constant 0 : i32
    %c0_i32_0 = arith.constant 0 : i32
    %c0_i32_1 = arith.constant 0 : i32
    return %c0_i32, %c0_i32_0 : i32, i32
  }
  func.func @transform_3(%arg0: i32, %arg1: i32) -> (i32, i32) {
    %c0_i32 = arith.constant 0 : i32
    %c0_i32_0 = arith.constant 0 : i32
    return %c0_i32, %arg1 : i32, i32
  }
  func.func @transform_4(%arg0: i32, %arg1: i32) -> (i32, i32) {
    %c0_i32 = arith.constant 0 : i32
    %c0_i32_0 = arith.constant 0 : i32
    return %c0_i32, %arg1 : i32, i32
  }
  func.func @transform_5(%arg0: i32, %arg1: i32) -> (i32, i32) {
    %c0_i32 = arith.constant 0 : i32
    %c0_i32_0 = arith.constant 0 : i32
    return %arg1, %c0_i32 : i32, i32
  }
  func.func @transform_6(%arg0: i32, %arg1: i32) -> (i32, i32) {
    %c0_i32 = arith.constant 0 : i32
    %c0_i32_0 = arith.constant 0 : i32
    %c0_i32_1 = arith.constant 0 : i32
    return %c0_i32, %c0_i32_0 : i32, i32
  }
  func.func @transform_7(%arg0: i32, %arg1: i32) -> (i32, i32) {
    %c0_i32 = arith.constant 0 : i32
    %c0_i32_0 = arith.constant 0 : i32
    return %arg0, %c0_i32 : i32, i32
  }
}

</mosaic_0001>

<llo_original>
// kernel: tpu_custom_call.1
$region0: #{tpu_custom_call.1}
  #allocation0 [shape = 'u32[]', space=smem, size = 0x4, offset = 0x4, fixed_abs, tag = 'smem constant byte address 0x4 - core index']
  #allocation1 [shape = 'u32[72,128]{1,0:T(1,128)}', space=vmem, size = 0x9000, scoped, tag = 'internal scratch']
  #allocation2 [shape = 'bf16[8,128]{1,0:T(8,128)(2,1)}', space=vmem, size = 0x800, scoped, tag = 'scratch operand']
  #allocation3 [shape = 'f32[8,128]{1,0:T(8,128)}', space=vmem, size = 0x1000, scoped, tag = 'scratch operand']
  %s0 = inlined_call_operand.hbm [shape: f32[8,128], index: 0, kind: input, shape index: {}]
  %s1 = inlined_call_operand.hbm [shape: f32[1,128], index: 1, kind: input, shape index: {}]
  %s2 = inlined_call_operand.vmem [shape: f32[1,128], index: 2, kind: input, shape index: {}]
  %s3 = inlined_call_operand.hbm [shape: bf16[128,128], index: 3, kind: input, shape index: {}]
  %s4 = inlined_call_operand.vmem [shape: f32[1,128], index: 4, kind: input, shape index: {}]
  %s5 = inlined_call_operand.hbm [shape: bf16[128,128], index: 5, kind: input, shape index: {}]
  %s6 = inlined_call_operand.vmem [shape: f32[1,128], index: 6, kind: input, shape index: {}]
  %s7 = inlined_call_operand.hbm [shape: f32[8,128], index: 7, kind: output, shape index: {}]
  %s8 = sld [smem:[#allocation0]]
  $region62: #{tpu_custom_call.1} parent=0
    _
  %s10 = ssub.s32 1, %s8
  %s11 = scalar_select 0, %s10, %s8
  $region1: #{tpu_custom_call.1} parent=0
    #allocation4 [shape = 'u8[4096]{0}', space=vmem, size = 0x1000, scoped, tag = 'input window, operand 0, single buffered']
    #allocation5 [shape = 's32[1]{0}', space=sflag, size = 0x4, scoped, tag = 'scoped memory for tpu_custom_call.1']
    #allocation6 [shape = 's32[1]{0}', space=sflag, size = 0x4, scoped, tag = 'scoped memory for tpu_custom_call.1']
    #allocation7 [shape = 'u8[512]{0}', space=vmem, size = 0x400, scoped, tag = 'input window, operand 1, single buffered']
    #allocation8 [shape = 's32[1]{0}', space=sflag, size = 0x4, scoped, tag = 'scoped memory for tpu_custom_call.1']
    #allocation9 [shape = 'u8[32768]{0}', space=vmem, size = 0x8000, scoped, tag = 'input window, operand 3, single buffered']
    #allocation10 [shape = 'u8[32768]{0}', space=vmem, size = 0x8000, scoped, tag = 'input window, operand 5, single buffered']
    #allocation11 [shape = 's32[1]{0}', space=sflag, size = 0x4, scoped, tag = 'scoped memory for tpu_custom_call.1']
    #allocation12 [shape = 'u8[4096]{0}', space=vmem, size = 0x1000, scoped, tag = 'output window, operand 0, single buffered']
    %12 = vsyncpa [#allocation5], 0
    %13 = vsyncpa [#allocation8], 0
    %14 = vsyncpa [#allocation11], 0
    %15 = vsyncpa [#allocation6], 0
    // Predicated region
    $region2: #{tpu_custom_call.1} parent=1 // pred_check
      _
    $region3: #{tpu_custom_call.1} parent=1 // pred_check_branch
      %17 = sbr.rel (0) target = $region5
    $region4: #{tpu_custom_call.1} parent=1 // pred_region
      %19 = vsyncadd [#allocation5], 0
      %s21 = sshll.u32 %s0, 4
      %s22 = int_to_ptr.hbm [resolvable:$true] %s21
      %s23 = sshll.u32 [#allocation4], 4
      %s24 = int_to_ptr.vmem [resolvable:$true] %s23
      %26 = dma.hbm_to_vmem [thread:$0]  %s22, 128, %s24, [#allocation5]
    $region5: #{tpu_custom_call.1} parent=1 // pred_fallthru
      _
    // Predicated region
    $region6: #{tpu_custom_call.1} parent=1 // pred_check
      _
    $region7: #{tpu_custom_call.1} parent=1 // pred_check_branch
      %28 = sbr.rel (0) target = $region9
    $region8: #{tpu_custom_call.1} parent=1 // pred_region
      %30 = vsyncadd [#allocation8], 0
      %s32 = sshll.u32 %s1, 4
      %s33 = int_to_ptr.hbm [resolvable:$true] %s32
      %s34 = sshll.u32 [#allocation7], 4
      %s35 = int_to_ptr.vmem [resolvable:$true] %s34
      %37 = dma.hbm_to_vmem [thread:$0]  %s33, 16, %s35, [#allocation8]
    $region9: #{tpu_custom_call.1} parent=1 // pred_fallthru
      _
    // Predicated region
    $region10: #{tpu_custom_call.1} parent=1 // pred_check
      _
    $region11: #{tpu_custom_call.1} parent=1 // pred_check_branch
      %39 = sbr.rel (0) target = $region13
    $region12: #{tpu_custom_call.1} parent=1 // pred_region
      _
    $region13: #{tpu_custom_call.1} parent=1 // pred_fallthru
      _
    // Predicated region
    $region14: #{tpu_custom_call.1} parent=1 // pred_check
      _
    $region15: #{tpu_custom_call.1} parent=1 // pred_check_branch
      %41 = sbr.rel (0) target = $region17
    $region16: #{tpu_custom_call.1} parent=1 // pred_region
      %43 = vsyncadd [#allocation8], 0
      %s44 = sshll.u32 %s3, 4
      %s45 = int_to_ptr.hbm [resolvable:$true] %s44
      %s46 = sshll.u32 [#allocation9], 4
      %s47 = int_to_ptr.vmem [resolvable:$true] %s46
      %52 = dma.hbm_to_vmem [thread:$0]  %s45, 1024, %s47, [#allocation8], 64, 64, 4
    $region17: #{tpu_custom_call.1} parent=1 // pred_fallthru
      _
    // Predicated region
    $region18: #{tpu_custom_call.1} parent=1 // pred_check
      _
    $region19: #{tpu_custom_call.1} parent=1 // pred_check_branch
      %54 = sbr.rel (0) target = $region21
    $region20: #{tpu_custom_call.1} parent=1 // pred_region
      _
    $region21: #{tpu_custom_call.1} parent=1 // pred_fallthru
      _
    // Predicated region
    $region22: #{tpu_custom_call.1} parent=1 // pred_check
      _
    $region23: #{tpu_custom_call.1} parent=1 // pred_check_branch
      %56 = sbr.rel (0) target = $region25
    $region24: #{tpu_custom_call.1} parent=1 // pred_region
      %58 = vsyncadd [#allocation11], 0
      %s59 = sshll.u32 %s5, 4
      %s60 = int_to_ptr.hbm [resolvable:$true] %s59
      %s61 = sshll.u32 [#allocation10], 4
      %s62 = int_to_ptr.vmem [resolvable:$true] %s61
      %67 = dma.hbm_to_vmem [thread:$0]  %s60, 1024, %s62, [#allocation11], 64, 64, 4
    $region25: #{tpu_custom_call.1} parent=1 // pred_fallthru
      _
    // Predicated region
    $region26: #{tpu_custom_call.1} parent=1 // pred_check
      _
    $region27: #{tpu_custom_call.1} parent=1 // pred_check_branch
      %69 = sbr.rel (0) target = $region29
    $region28: #{tpu_custom_call.1} parent=1 // pred_region
      _
    $region29: #{tpu_custom_call.1} parent=1 // pred_fallthru
      _
    // Predicated region
    $region30: #{tpu_custom_call.1} parent=1 // pred_check
      _
    $region31: #{tpu_custom_call.1} parent=1 // pred_check_branch
      %71 = sbr.rel (0) target = $region33
    $region32: #{tpu_custom_call.1} parent=1 // pred_region
      %73 = dma.done [#allocation5], 128
    $region33: #{tpu_custom_call.1} parent=1 // pred_fallthru
      _
    // Predicated region
    $region34: #{tpu_custom_call.1} parent=1 // pred_check
      _
    $region35: #{tpu_custom_call.1} parent=1 // pred_check_branch
      %75 = sbr.rel (0) target = $region37
    $region36: #{tpu_custom_call.1} parent=1 // pred_region
      %77 = dma.done [#allocation8], 16
    $region37: #{tpu_custom_call.1} parent=1 // pred_fallthru
      _
    // Predicated region
    $region38: #{tpu_custom_call.1} parent=1 // pred_check
      _
    $region39: #{tpu_custom_call.1} parent=1 // pred_check_branch
      %79 = sbr.rel (0) target = $region41
    $region40: #{tpu_custom_call.1} parent=1 // pred_region
      %81 = dma.done [#allocation8], 1024
    $region41: #{tpu_custom_call.1} parent=1 // pred_fallthru
      _
    // Predicated region
    $region42: #{tpu_custom_call.1} parent=1 // pred_check
      _
    $region43: #{tpu_custom_call.1} parent=1 // pred_check_branch
      %83 = sbr.rel (0) target = $region45
    $region44: #{tpu_custom_call.1} parent=1 // pred_region
      %85 = dma.done [#allocation11], 1024
    $region45: #{tpu_custom_call.1} parent=1 // pred_fallthru
      _
    %p86 = scmp.eq.s32.totalorder 0, 0
    // Predicated region
    $region46: #{tpu_custom_call.1} parent=1 // pred_check
      %p87 = pneg %p86
    $region47: #{tpu_custom_call.1} parent=1 // pred_check_branch
      %89 = sbr.rel (%p87) target = $region49
    $region48: #{tpu_custom_call.1} parent=1 // pred_region
      %v90 = vld [vmem:[#allocation4] sm:$0xff]
      %91 = vadd.xlane.f32.xlu0 %v90
      %v92 = vpop.xlane.xlu0 %91
      %v93 = vmul.f32 %v92, 0.03125
      %v94 = vmul.f32 %v90, %v90
      %95 = vadd.xlane.f32.xlu0 %v94
      %v96 = vpop.xlane.xlu0 %95
      %v97 = vmul.f32 %v96, 0.03125
      %v98 = vmul.f32 %v93, %v93
      %v99 = vsub.f32 %v97, %v98
      %v100 = vmax.f32 %v99, 0.0
      %v101 = vsub.f32 %v90, %v93
      %v102 = vadd.f32 %v100, 1e-05
      %v103 = vrsqrt.pop %v102
      %v104 = vmul.f32 %v103, %v102
      %v105 = vmul.f32 %v104, %v103
      %v106 = vmul.f32 0.5, %v105
      %v107 = vsub.f32 1.5, %v106
      %v108 = vmul.f32 %v103, %v107
      %vm109 = vweird.f32 %v102
      %vm110 = vweird.f32 %v103
      %vm111 = vmor %vm109, %vm110
      %v112 = vsel %vm111, %v103, %v108
      %v113 = vmul.f32 %v101, %v112
      %v114 = vld [vmem:[#allocation7] sm:$0x1]
      %v116 = vperm.slane %v114, 0
      %v118 = vmul.f32 %v113, %v116
      %v119 = vld [vmem:[%s2] sm:$0x1]
      %v121 = vperm.slane %v119, 0
      %v123 = vadd.f32 %v118, %v121
      %v124 = vpack.c.bf16 %v123, %v123
      %125 = vst [vmem:[#allocation2] sm:$0xf] %v124
      %126 = vst [vmem:[#allocation3] sm:$0xff] 0.0
    $region49: #{tpu_custom_call.1} parent=1 // pred_fallthru
      _
    %v127 = vld [vmem:[#allocation2] sm:$0xf]
    %v128 = vld [vmem:[#allocation9] sm:$0xf]
    %v129 = vld [vmem:[#allocation9 + $0x4] sm:$0xf]
    %v130 = vld [vmem:[#allocation9 + $0x8] sm:$0xf]
    %v131 = vld [vmem:[#allocation9 + $0xc] sm:$0xf]
    %v132 = vld [vmem:[#allocation9 + $0x10] sm:$0xf]
    %v133 = vld [vmem:[#allocation9 + $0x14] sm:$0xf]
    %v134 = vld [vmem:[#allocation9 + $0x18] sm:$0xf]
    %v135 = vld [vmem:[#allocation9 + $0x1c] sm:$0xf]
    %v136 = vld [vmem:[#allocation9 + $0x20] sm:$0xf]
    %v137 = vld [vmem:[#allocation9 + $0x24] sm:$0xf]
    %v138 = vld [vmem:[#allocation9 + $0x28] sm:$0xf]
    %v139 = vld [vmem:[#allocation9 + $0x2c] sm:$0xf]
    %v140 = vld [vmem:[#allocation9 + $0x30] sm:$0xf]
    %v141 = vld [vmem:[#allocation9 + $0x34] sm:$0xf]
    %v142 = vld [vmem:[#allocation9 + $0x38] sm:$0xf]
    %v143 = vld [vmem:[#allocation9 + $0x3c] sm:$0xf]
    %v144 = vld [vmem:[%s4] sm:$0x1]
    %v146 = vperm.slane %v144, 0
    %v164 = vunpack.c.l.b16 %v128
    %v165 = vunpack.c.l.b16 %v129
    %v166 = vunpack.c.l.b16 %v130
    %v167 = vunpack.c.l.b16 %v131
    %v168 = vunpack.c.l.b16 %v132
    %v169 = vunpack.c.l.b16 %v133
    %v170 = vunpack.c.l.b16 %v134
    %v171 = vunpack.c.l.b16 %v135
    %v172 = vunpack.c.l.b16 %v136
    %v173 = vunpack.c.l.b16 %v137
    %v174 = vunpack.c.l.b16 %v138
    %v175 = vunpack.c.l.b16 %v139
    %v176 = vunpack.c.l.b16 %v140
    %v177 = vunpack.c.l.b16 %v141
    %v178 = vunpack.c.l.b16 %v142
    %v179 = vunpack.c.l.b16 %v143
    %v180 = vpack.c.b16 %v165, %v164
    %v181 = vpack.c.b16 %v167, %v166
    %v182 = vpack.c.b16 %v169, %v168
    %v183 = vpack.c.b16 %v171, %v170
    %v184 = vpack.c.b16 %v173, %v172
    %v185 = vpack.c.b16 %v175, %v174
    %v186 = vpack.c.b16 %v177, %v176
    %v187 = vpack.c.b16 %v179, %v178
    %196 = vmatpush.bf16.msra.mxu0 %v187
    %197 = vmatpush.bf16.msra.mxu0 %v186
    %198 = vmatpush.bf16.msra.mxu0 %v185
    %199 = vmatpush.bf16.msra.mxu0 %v184
    %200 = vmatpush.bf16.msra.mxu0 %v183
    %201 = vmatpush.bf16.msra.mxu0 %v182
    %202 = vmatpush.bf16.msra.mxu0 %v181
    %203 = vmatpush.bf16.msra.mxu0 %v180
    %204 = vmatmul.bf16.gmra.mxu0 %v127
    %v205 = vpop.f32.mrf.mxu0
    %v206 = vadd.f32 %v146, %v205
    %v207 = vpop.f32.mrf.mxu0
    %208 = vdwg.mxu0
    %v209 = vmax.f32 %v206, 0.0
    %v210 = vpack.c.bf16 %v209, %v209
    %v211 = vld [vmem:[#allocation3] sm:$0xff]
    %v212 = vld [vmem:[#allocation10] sm:$0xf]
    %v213 = vld [vmem:[#allocation10 + $0x4] sm:$0xf]
    %v214 = vld [vmem:[#allocation10 + $0x8] sm:$0xf]
    %v215 = vld [vmem:[#allocation10 + $0xc] sm:$0xf]
    %v216 = vld [vmem:[#allocation10 + $0x10] sm:$0xf]
    %v217 = vld [vmem:[#allocation10 + $0x14] sm:$0xf]
    %v218 = vld [vmem:[#allocation10 + $0x18] sm:$0xf]
    %v219 = vld [vmem:[#allocation10 + $0x1c] sm:$0xf]
    %v220 = vld [vmem:[#allocation10 + $0x20] sm:$0xf]
    %v221 = vld [vmem:[#allocation10 + $0x24] sm:$0xf]
    %v222 = vld [vmem:[#allocation10 + $0x28] sm:$0xf]
    %v223 = vld [vmem:[#allocation10 + $0x2c] sm:$0xf]
    %v224 = vld [vmem:[#allocation10 + $0x30] sm:$0xf]
    %v225 = vld [vmem:[#allocation10 + $0x34] sm:$0xf]
    %v226 = vld [vmem:[#allocation10 + $0x38] sm:$0xf]
    %v227 = vld [vmem:[#allocation10 + $0x3c] sm:$0xf]
    %v244 = vunpack.c.l.b16 %v212
    %v245 = vunpack.c.l.b16 %v213
    %v246 = vunpack.c.l.b16 %v214
    %v247 = vunpack.c.l.b16 %v215
    %v248 = vunpack.c.l.b16 %v216
    %v249 = vunpack.c.l.b16 %v217
    %v250 = vunpack.c.l.b16 %v218
    %v251 = vunpack.c.l.b16 %v219
    %v252 = vunpack.c.l.b16 %v220
    %v253 = vunpack.c.l.b16 %v221
    %v254 = vunpack.c.l.b16 %v222
    %v255 = vunpack.c.l.b16 %v223
    %v256 = vunpack.c.l.b16 %v224
    %v257 = vunpack.c.l.b16 %v225
    %v258 = vunpack.c.l.b16 %v226
    %v259 = vunpack.c.l.b16 %v227
    %v260 = vpack.c.b16 %v245, %v244
    %v261 = vpack.c.b16 %v247, %v246
    %v262 = vpack.c.b16 %v249, %v248
    %v263 = vpack.c.b16 %v251, %v250
    %v264 = vpack.c.b16 %v253, %v252
    %v265 = vpack.c.b16 %v255, %v254
    %v266 = vpack.c.b16 %v257, %v256
    %v267 = vpack.c.b16 %v259, %v258
    %276 = vmatpush.bf16.msra.mxu0 %v267
    %277 = vmatpush.bf16.msra.mxu0 %v266
    %278 = vmatpush.bf16.msra.mxu0 %v265
    %279 = vmatpush.bf16.msra.mxu0 %v264
    %280 = vmatpush.bf16.msra.mxu0 %v263
    %281 = vmatpush.bf16.msra.mxu0 %v262
    %282 = vmatpush.bf16.msra.mxu0 %v261
    %283 = vmatpush.bf16.msra.mxu0 %v260
    %284 = vmatmul.bf16.gmra.mxu0 %v210
    %v285 = vpop.f32.mrf.mxu0
    %v286 = vadd.f32 0.0, %v285
    %v287 = vpop.f32.mrf.mxu0
    %288 = vdwg.mxu0
    %v289 = vadd.f32 %v211, %v286
    %290 = vst [vmem:[#allocation3] sm:$0xff] %v289
    // Predicated region
    $region50: #{tpu_custom_call.1} parent=1 // pred_check
      %p291 = pneg %p86
    $region51: #{tpu_custom_call.1} parent=1 // pred_check_branch
      %293 = sbr.rel (%p291) target = $region53
    $region52: #{tpu_custom_call.1} parent=1 // pred_region
      %v294 = vld [vmem:[#allocation3] sm:$0xff]
      %v295 = vld [vmem:[%s6] sm:$0x1]
      %v297 = vperm.slane %v295, 0
      %v299 = vadd.f32 %v294, %v297
      %300 = vst [vmem:[#allocation12] sm:$0xff] %v299
    $region53: #{tpu_custom_call.1} parent=1 // pred_fallthru
      _
    // Predicated region
    $region54: #{tpu_custom_call.1} parent=1 // pred_check
      _
    $region55: #{tpu_custom_call.1} parent=1 // pred_check_branch
      %302 = sbr.rel (0) target = $region57
    $region56: #{tpu_custom_call.1} parent=1 // pred_region
      %304 = vsyncadd [#allocation6], 0
      %s306 = sshll.u32 [#allocation12], 4
      %s307 = int_to_ptr.vmem [resolvable:$true] %s306
      %s308 = sshll.u32 %s7, 4
      %s309 = int_to_ptr.hbm [resolvable:$true] %s308
      %311 = dma.vmem_to_hbm [thread:$0]  %s307, 128, %s309, [#allocation6]
    $region57: #{tpu_custom_call.1} parent=1 // pred_fallthru
      _
    // Predicated region
    $region58: #{tpu_custom_call.1} parent=1 // pred_check
      _
    $region59: #{tpu_custom_call.1} parent=1 // pred_check_branch
      %313 = sbr.rel (0) target = $region61
    $region60: #{tpu_custom_call.1} parent=1 // pred_region
      %315 = dma.done [#allocation6], 128
    $region61: #{tpu_custom_call.1} parent=1 // pred_fallthru
      _
    %316 = vsyncpa [#allocation5], 1
    %317 = vsyncpa [#allocation8], 1
    %318 = vsyncpa [#allocation11], 1
    %319 = vsyncpa [#allocation6], 1

</llo_original>
